<compile_context>
chip_gen: v7x
topology: tpu7x:2x2x1
jax: 0.10.0
libtpu: 0.0.40
codegen_flags: <defaults>
</compile_context>

<pallas_src>
import jax
import jax.numpy as jnp
from jax import lax
from jax.experimental import pallas as pl
from jax.experimental.pallas import tpu as pltpu


def _round_up(x, m):
    return ((x + m - 1) // m) * m


# ---------------------------------------------------------------------------
# Kernels
# ---------------------------------------------------------------------------
def _fused_kernel(patch_ref, w_ref, b_ref, out_ref):
    """out = patches @ (Wc @ Wp) + b ; one MXU matmul per row tile."""
    # patch_ref: (TM, K)   bf16
    # w_ref    : (K, Ep)   bf16   (pre-fused conv o proj weight)
    # b_ref    : (1, Ep)   f32    (pre-fused bias)
    # out_ref  : (TM, Ep)  bf16 (f32 accumulate, cast on store)
    acc = jnp.dot(patch_ref[...], w_ref[...],
                  preferred_element_type=jnp.float32)
    out_ref[...] = (acc + b_ref[...]).astype(out_ref.dtype)


def _two_stage_kernel(patch_ref, wc_ref, wp_ref, b_ref, out_ref):
    """out = (patches @ Wc) @ Wp + b ; keeps the rank-Fd factorization."""
    # patch_ref: (TM, K)   bf16
    # wc_ref   : (K, Fd)   bf16   (patchify-conv weight, im2col layout)
    # wp_ref   : (Fd, Ep)  bf16   (projection weight)
    # b_ref    : (1, Ep)   f32    (fused bias: conv_b @ Wp + proj_b)
    feat = jnp.dot(patch_ref[...], wc_ref[...],
                   preferred_element_type=jnp.float32)
    acc = jnp.dot(feat.astype(jnp.bfloat16), wp_ref[...],
                  preferred_element_type=jnp.float32)
    out_ref[...] = (acc + b_ref[...]).astype(out_ref.dtype)


# ---------------------------------------------------------------------------
# One-time parameter preparation (hoisted out of the per-call forward)
# ---------------------------------------------------------------------------
def prepare_hybrid_embed_params(conv_w, conv_b, proj_w, proj_b, *, fuse=None):
    """conv_w: (Fd, C, ps, ps) patchify conv (kernel == stride), conv_b: (Fd,)
    proj_w: (E, Fd) torch.nn.Linear layout, proj_b: (E,)."""
    Fd, C, ps, ps2 = conv_w.shape
    assert ps == ps2
    E = proj_w.shape[0]
    K = C * ps * ps
    Ep = _round_up(E, 128)                 # lane-dense output stores

    wc = conv_w.reshape(Fd, K).T.astype(jnp.float32)               # (K, Fd)
    wp = proj_w.T.astype(jnp.float32)                              # (Fd, E)
    b_fused = conv_b.astype(jnp.float32) @ wp + proj_b.astype(jnp.float32)
    b_pad = jnp.pad(b_fused, (0, Ep - E)).reshape(1, Ep)           # keep f32

    if fuse is None:
        # Fusing Wc@Wp into a full (K, E) matrix only pays off when the rank
        # Fd is large enough; a low-rank backbone keeps the two-stage matmul
        # (fewer MXU FLOPs, less weight VMEM residency).
        fuse = Fd * (K + E) >= K * E
    if fuse:
        w_fused = jnp.pad(wc @ wp, ((0, 0), (0, Ep - E)))           # (K, Ep)
        weights = (w_fused.astype(jnp.bfloat16), b_pad)
    else:
        wp_pad = jnp.pad(wp, ((0, 0), (0, Ep - E)))                 # (Fd, Ep)
        weights = (wc.astype(jnp.bfloat16), wp_pad.astype(jnp.bfloat16),
                   b_pad)

    return dict(fused=bool(fuse), weights=weights, patch_size=ps, in_chans=C,
                feature_dim=Fd, embed_dim=E, embed_dim_padded=Ep)


# ---------------------------------------------------------------------------
# Forward
# ---------------------------------------------------------------------------
def hybrid_embed_forward(x, params, *, tm=512, out_dtype=jnp.bfloat16):
    """x: (N, C, H, W) NCHW float32. Returns (N, num_patches, embed_dim)."""
    N, C, H, W = x.shape
    assert C == params["in_chans"]
    ps = params["patch_size"]
    Hp, Wp = H // ps, W // ps
    P = Hp * Wp
    K = C * ps * ps
    Fd = params["feature_dim"]
    E = params["embed_dim"]
    Ep = params["embed_dim_padded"]
    M = N * P

    # im2col of the non-overlapping patchify conv; row order (C, ps, ps)
    # matches conv_w.reshape(Fd, K).  allow_input_fusion below lets XLA fuse
    # this transpose/cast into the pallas_call input stream.
    patches = x.reshape(N, C, Hp, ps, Wp, ps)
    patches = patches.transpose(0, 2, 4, 1, 3, 5).reshape(M, K)
    patches = patches.astype(jnp.bfloat16)

    TM = min(tm, _round_up(M, 8))          # row tile, multiple of 8 sublanes
    grid = (pl.cdiv(M, TM),)               # no M padding: ragged final block
                                           # is masked by Pallas on store

    patch_spec = pl.BlockSpec((TM, K), lambda i: (i, 0))
    if params["fused"]:
        kernel = _fused_kernel
        weight_specs = [pl.BlockSpec((K, Ep), lambda i: (0, 0)),
                        pl.BlockSpec((1, Ep), lambda i: (0, 0))]
    else:
        kernel = _two_stage_kernel
        weight_specs = [pl.BlockSpec((K, Fd), lambda i: (0, 0)),
                        pl.BlockSpec((Fd, Ep), lambda i: (0, 0)),
                        pl.BlockSpec((1, Ep), lambda i: (0, 0))]

    out = pl.pallas_call(
        kernel,
        out_shape=jax.ShapeDtypeStruct((M, Ep), out_dtype),
        grid_spec=pltpu.PrefetchScalarGridSpec(
            num_scalar_prefetch=0,
            grid=grid,
            in_specs=[patch_spec] + weight_specs,
            out_specs=pl.BlockSpec((TM, Ep), lambda i: (i, 0)),
        ),
        compiler_params=pltpu.CompilerParams(
            dimension_semantics=("parallel",),
            # Let the im2col/cast producer of `patches` fuse into the input
            # pipeline instead of materializing a separate HBM pass.
            allow_input_fusion=[True] + [False] * len(params["weights"]),
            # TODO(synk): for TM=1024 pass vmem_limit_bytes (~24-32 MiB) here;
            # on v7x also single-buffer the constant weight/bias blocks.
        ),
    )(patches, *params["weights"])

    if Ep != E:                            # free when embed_dim % 128 == 0
        out = out[:, :E]
    return out.reshape(N, P, E)


# ---------------------------------------------------------------------------
# Pure-JAX f32 reference matching the PyTorch semantics
# ---------------------------------------------------------------------------
def reference_forward(x, conv_w, conv_b, proj_w, proj_b, patch_size):
    feat = lax.conv_general_dilated(
        x, conv_w,
        window_strides=(patch_size, patch_size),
        padding="VALID",
        dimension_numbers=("NCHW", "OIHW", "NCHW"),
    ) + conv_b.reshape(1, -1, 1, 1)                          # (N, Fd, Hp, Wp)
    N, Fd, Hp, Wp = feat.shape
    feat = feat.reshape(N, Fd, Hp * Wp).transpose(0, 2, 1)   # (N, P, Fd)
    return feat @ proj_w.T + proj_b                          # (N, P, E)


if __name__ == "__main__":
    # Small, deterministic shapes consistent with the module.
    N, C, H, W = 2, 3, 16, 16     # input image, NCHW
    ps = 4                        # backbone downsampling (patchify conv)
    Fd = 32                       # backbone feature_dim
    E = 64                        # embed_dim
    # feature_size = (4, 4) -> num_patches = 16, M = 32, K = 48

    key = jax.random.PRNGKey(0)
    k_x, k_cw, k_cb, k_pw, k_pb = jax.random.split(key, 5)
    x = jax.random.normal(k_x, (N, C, H, W), dtype=jnp.float32)
    conv_w = 0.05 * jax.random.normal(k_cw, (Fd, C, ps, ps), dtype=jnp.float32)
    conv_b = 0.05 * jax.random.normal(k_cb, (Fd,), dtype=jnp.float32)
    proj_w = 0.05 * jax.random.normal(k_pw, (E, Fd), dtype=jnp.float32)
    proj_b = 0.05 * jax.random.normal(k_pb, (E,), dtype=jnp.float32)

    ref = reference_forward(x, conv_w, conv_b, proj_w, proj_b, ps)

    # Path 1: fused single-matmul kernel (chosen automatically since
    # Fd*(K+E) >= K*E here), default row tile.
    params_fused = prepare_hybrid_embed_params(conv_w, conv_b, proj_w, proj_b)
    fwd_fused = jax.jit(lambda xx: hybrid_embed_forward(xx, params_fused))
    out_fused = jax.block_until_ready(fwd_fused(x))
    assert out_fused.shape == (N, (H // ps) * (W // ps), E), out_fused.shape
    err = float(jnp.max(jnp.abs(out_fused.astype(jnp.float32) - ref)))
    assert err < 2e-2, err        # bf16 MXU operands + bf16 output store

    # Path 2: two-stage (rank-Fd) kernel, forced, with a row tile that does
    # not divide M so the ragged final block path is exercised too.
    params_2s = prepare_hybrid_embed_params(conv_w, conv_b, proj_w, proj_b,
                                            fuse=False)
    fwd_2s = jax.jit(lambda xx: hybrid_embed_forward(xx, params_2s, tm=24))
    out_2s = jax.block_until_ready(fwd_2s(x))
    err2 = float(jnp.max(jnp.abs(out_2s.astype(jnp.float32) - ref)))
    assert err2 < 2e-2, err2

    print("KERNEL_OK")
</pallas_src>

<mosaic_0001>
module attributes {stable_mosaic.version = 11 : i64} {
  func.func @_fused_kernel(%arg0: i32, %arg1: memref<32x48xbf16, #tpu.memory_space<vmem>>, %arg2: memref<48x128xbf16, #tpu.memory_space<vmem>>, %arg3: memref<1x128xf32, #tpu.memory_space<vmem>>, %arg4: memref<32x128xbf16, #tpu.memory_space<vmem>>) attributes {dimension_semantics = [#tpu.dimension_semantics<parallel>], iteration_bounds = array<i64: 1>, scalar_prefetch = 0 : i64, scratch_operands = 0 : i64, tpu.core_type = #tpu.core_type<tc>, window_params = [{transform_indices = @transform_0, window_bounds = array<i64: 32, 48>}, {pipeline_mode = #tpu.pipeline_mode<synchronous>, transform_indices = @transform_1, window_bounds = array<i64: 48, 128>}, {pipeline_mode = #tpu.pipeline_mode<synchronous>, transform_indices = @transform_2, window_bounds = array<i64: 1, 128>}, {transform_indices = @transform_3, window_bounds = array<i64: 32, 128>}]} {
    %c0 = arith.constant 0 : index
    %c0_0 = arith.constant 0 : index
    %0 = vector.load %arg1[%c0, %c0_0] : memref<32x48xbf16, #tpu.memory_space<vmem>>, vector<32x48xbf16>
    %c0_1 = arith.constant 0 : index
    %c0_2 = arith.constant 0 : index
    %1 = vector.load %arg2[%c0_1, %c0_2] : memref<48x128xbf16, #tpu.memory_space<vmem>>, vector<48x128xbf16>
    %cst = arith.constant dense<0.000000e+00> : vector<32x128xf32>
    %2 = tpu.matmul %0, %1, %cst {dimension_numbers = #tpu.dot_dimension_numbers<[1], [0], [0], [1], [0, 0, 1, 1], [], []>} : vector<32x48xbf16>, vector<48x128xbf16>, vector<32x128xf32> -> vector<32x128xf32>
    %c0_3 = arith.constant 0 : index
    %c0_4 = arith.constant 0 : index
    %3 = vector.load %arg3[%c0_3, %c0_4] : memref<1x128xf32, #tpu.memory_space<vmem>>, vector<1x128xf32>
    %4 = vector.broadcast %3 : vector<1x128xf32> to vector<32x128xf32>
    %5 = arith.addf %2, %4 : vector<32x128xf32>
    %6 = arith.truncf %5 : vector<32x128xf32> to vector<32x128xbf16>
    %c0_5 = arith.constant 0 : index
    %c0_6 = arith.constant 0 : index
    %7 = vector.load %arg4[%c0_5, %c0_6] : memref<32x128xbf16, #tpu.memory_space<vmem>>, vector<32x128xbf16>
    tpu.vector_store %arg4[%c0_5, %c0_6], %6 {strides = array<i32>} : memref<32x128xbf16, #tpu.memory_space<vmem>>, vector<32x128xbf16>,
    return
  }
  func.func @transform_0(%arg0: i32) -> (i32, i32) {
    %c0_i32 = arith.constant 0 : i32
    %c0_i32_0 = arith.constant 0 : i32
    return %arg0, %c0_i32 : i32, i32
  }
  func.func @transform_1(%arg0: i32) -> (i32, i32) {
    %c0_i32 = arith.constant 0 : i32
    %c0_i32_0 = arith.constant 0 : i32
    %c0_i32_1 = arith.constant 0 : i32
    return %c0_i32, %c0_i32_0 : i32, i32
  }
  func.func @transform_2(%arg0: i32) -> (i32, i32) {
    %c0_i32 = arith.constant 0 : i32
    %c0_i32_0 = arith.constant 0 : i32
    %c0_i32_1 = arith.constant 0 : i32
    return %c0_i32, %c0_i32_0 : i32, i32
  }
  func.func @transform_3(%arg0: i32) -> (i32, i32) {
    %c0_i32 = arith.constant 0 : i32
    %c0_i32_0 = arith.constant 0 : i32
    return %arg0, %c0_i32 : i32, i32
  }
}

</mosaic_0001>

<llo_original>
// kernel: _lambda_.1
$region0: #{_lambda_.1}
  #allocation0 [shape = 'u32[]', space=smem, size = 0x4, offset = 0x4, fixed_abs, tag = 'smem constant byte address 0x4 - core index']
  #allocation1 [shape = 'u32[144,128]{1,0:T(1,128)}', space=vmem, size = 0x12000, scoped, tag = 'internal scratch']
  %s0 = inlined_call_operand.vmem [shape: bf16[32,48], index: 0, kind: input, shape index: {}]
  %s1 = inlined_call_operand.vmem [shape: bf16[48,128], index: 1, kind: input, shape index: {}]
  %s2 = inlined_call_operand.vmem [shape: f32[1,128], index: 2, kind: input, shape index: {}]
  %s3 = inlined_call_operand.hbm [shape: bf16[32,128], index: 3, kind: output, shape index: {}]
  %s4 = sld [smem:[#allocation0]]
  $region22: #{_lambda_.1} parent=0
    _
  %s6 = ssub.s32 1, %s4
  %s7 = scalar_select 0, %s6, %s4
  $region1: #{_lambda_.1} parent=0
    #allocation2 [shape = 'u8[8192]{0}', space=vmem, size = 0x2000, scoped, tag = 'output window, operand 0, single buffered']
    #allocation3 [shape = 's32[1]{0}', space=sflag, size = 0x4, scoped, tag = 'scoped memory for _lambda_.1']
    %8 = vsyncpa [#allocation3], 0
    // Predicated region
    $region2: #{_lambda_.1} parent=1 // pred_check
      _
    $region3: #{_lambda_.1} parent=1 // pred_check_branch
      %10 = sbr.rel (0) target = $region5
    $region4: #{_lambda_.1} parent=1 // pred_region
      _
    $region5: #{_lambda_.1} parent=1 // pred_fallthru
      _
    // Predicated region
    $region6: #{_lambda_.1} parent=1 // pred_check
      _
    $region7: #{_lambda_.1} parent=1 // pred_check_branch
      %12 = sbr.rel (0) target = $region9
    $region8: #{_lambda_.1} parent=1 // pred_region
      _
    $region9: #{_lambda_.1} parent=1 // pred_fallthru
      _
    // Predicated region
    $region10: #{_lambda_.1} parent=1 // pred_check
      _
    $region11: #{_lambda_.1} parent=1 // pred_check_branch
      %14 = sbr.rel (0) target = $region13
    $region12: #{_lambda_.1} parent=1 // pred_region
      _
    $region13: #{_lambda_.1} parent=1 // pred_fallthru
      _
    %v16 = vld [vmem:[%s0] sm:$0xf]
    %v17 = vld [vmem:[%s0 + $0x4] sm:$0xf]
    %v18 = vld [vmem:[%s0 + $0x8] sm:$0xf]
    %v19 = vld [vmem:[%s0 + $0xc] sm:$0xf]
    %v20 = vld [vmem:[%s1] sm:$0xf]
    %v21 = vld [vmem:[%s1 + $0x4] sm:$0xf]
    %v22 = vld [vmem:[%s1 + $0x8] sm:$0xf]
    %v23 = vld [vmem:[%s1 + $0xc] sm:$0xf]
    %v24 = vld [vmem:[%s1 + $0x10] sm:$0xf]
    %v25 = vld [vmem:[%s1 + $0x14] sm:$0xf]
    %v26 = vld [vmem:[%s2] sm:$0x1]
    %v28 = vlaneseq
    %v29 = vshrl.u32 %v28, 7
    %v30 = vsub.s32 0, %v29
    %v31 = vrot.slane %v26, %v30
    %v37 = vunpack.c.l.b16 %v16
    %v38 = vunpack.c.l.b16 %v17
    %v39 = vunpack.c.l.b16 %v18
    %v40 = vunpack.c.l.b16 %v19
    %v41 = vpack.c.b16 %v38, %v37
    %v42 = vpack.c.b16 %v40, %v39
    %v49 = vunpack.c.l.b16 %v20
    %v50 = vunpack.c.l.b16 %v21
    %v51 = vunpack.c.l.b16 %v22
    %v52 = vunpack.c.l.b16 %v23
    %v53 = vunpack.c.l.b16 %v24
    %v54 = vunpack.c.l.b16 %v25
    %v55 = vpack.c.b16 %v50, %v49
    %v56 = vpack.c.b16 %v52, %v51
    %v57 = vpack.c.b16 %v54, %v53
    %vm61 = vcmask 392192
    %v63 = vsel %vm61, %v41, 0
    %v66 = vsel %vm61, %v42, 0
    %68 = vmatprep.subr.bf16.mxu0 0
    %69 = vmatpush1.bf16.msra.mxu0 %v55
    %70 = vmatprep.subr.bf16.mxu0 0
    %71 = vmatpush1.bf16.msra.mxu0 %v56
    %72 = vmatprep.subr.bf16.mxu0 0
    %73 = vmatpush1.bf16.msra.mxu0 %v57
    %74 = vmatprep.subr.bf16.mxu0 0
    %75 = vmatpush1.bf16.msra.mxu0 0
    %76 = vmatprep.subr.bf16.mxu0 0
    %77 = vmatpush1.bf16.msra.mxu0 0
    %78 = vmatprep.subr.bf16.mxu0 0
    %79 = vmatpush1.bf16.msra.mxu0 0
    %80 = vmatprep.subr.bf16.mxu0 0
    %81 = vmatpush1.bf16.msra.mxu0 0
    %82 = vmatprep.subr.bf16.mxu0 0
    %83 = vmatpush1.bf16.msra.mxu0 0
    %84 = vmatprep.subr.bf16.mxu0 0
    %85 = vmatpush1.bf16.msra.mxu0 0
    %86 = vmatprep.subr.bf16.mxu0 0
    %87 = vmatpush1.bf16.msra.mxu0 0
    %88 = vmatprep.subr.bf16.mxu0 0
    %89 = vmatpush1.bf16.msra.mxu0 0
    %90 = vmatprep.subr.bf16.mxu0 0
    %91 = vmatpush1.bf16.msra.mxu0 0
    %92 = vmatprep.subr.bf16.mxu0 0
    %93 = vmatpush1.bf16.msra.mxu0 0
    %94 = vmatprep.subr.bf16.mxu0 0
    %95 = vmatpush1.bf16.msra.mxu0 0
    %96 = vmatprep.subr.bf16.mxu0 0
    %97 = vmatpush1.bf16.msra.mxu0 0
    %98 = vmatprep.subr.bf16.mxu0 0
    %99 = vmatpush1.bf16.msra.mxu0 0
    %100 = vmatprep.mubr.bf16.mxu0 0
    %101 = vmatmul.mubr.bf16.gmra.mrb[0].mxu0 %v63
    %v102 = vpop.f32.mrb[0].mxu0
    %v103 = vadd.f32 %v31, %v102
    %v104 = vpop.f32.mrb[0].mxu0
    %v105 = vpop.f32.mrb[0].mxu0
    %v106 = vadd.f32 %v31, %v105
    %v107 = vpop.f32.mrb[0].mxu0
    %108 = vmatprep.mubr.bf16.mxu0 0
    %109 = vmatmul.mubr.bf16.gmra.mrb[0].mxu0 %v66
    %v110 = vpop.f32.mrb[0].mxu0
    %v111 = vadd.f32 %v31, %v110
    %v112 = vpop.f32.mrb[0].mxu0
    %v113 = vpop.f32.mrb[0].mxu0
    %v114 = vadd.f32 %v31, %v113
    %v115 = vpop.f32.mrb[0].mxu0
    %116 = vdwg.mxu0
    %v117 = vpack.c.bf16 %v106, %v103
    %v118 = vpack.c.bf16 %v114, %v111
    %v121 = vunpack.c.l.b16 %v117
    %v122 = vunpack.c.h.b16 %v117
    %v123 = vunpack.c.l.b16 %v118
    %v124 = vunpack.c.h.b16 %v118
    %v125 = vpack.c.b16 %v121, %v121
    %v126 = vpack.c.b16 %v122, %v122
    %v127 = vpack.c.b16 %v123, %v123
    %v128 = vpack.c.b16 %v124, %v124
    %133 = vst [vmem:[#allocation2] sm:$0xf] %v125
    %134 = vst [vmem:[#allocation2 + $0x4] sm:$0xf] %v126
    %135 = vst [vmem:[#allocation2 + $0x8] sm:$0xf] %v127
    %136 = vst [vmem:[#allocation2 + $0xc] sm:$0xf] %v128
    // Predicated region
    $region14: #{_lambda_.1} parent=1 // pred_check
      _
    $region15: #{_lambda_.1} parent=1 // pred_check_branch
      %138 = sbr.rel (0) target = $region17
    $region16: #{_lambda_.1} parent=1 // pred_region
      %s140 = ssub.s32 256, 256
      %141 = vsyncadd [#allocation3], %s140
      %s142 = sshll.u32 [#allocation2], 4
      %s143 = int_to_ptr.vmem [resolvable:$true] %s142
      %148 = dma.vmem_to_hbm [thread:$0]  %s143, 256, %s3, [#allocation3], 64, 64, 4
    $region17: #{_lambda_.1} parent=1 // pred_fallthru
      _
    // Predicated region
    $region18: #{_lambda_.1} parent=1 // pred_check
      _
    $region19: #{_lambda_.1} parent=1 // pred_check_branch
      %150 = sbr.rel (0) target = $region21
    $region20: #{_lambda_.1} parent=1 // pred_region
      %151 = dma.done [#allocation3], 256
    $region21: #{_lambda_.1} parent=1 // pred_fallthru
      _
    %152 = vsyncpa [#allocation3], 1

</llo_original>
